<compile_context>
chip_gen: v5e
topology: v5e:2x2
jax: 0.10.0
libtpu: 0.0.40
codegen_flags: <defaults>
</compile_context>

<pallas_src>
import jax
import jax.numpy as jnp
import numpy as np
from jax.experimental import pallas as pl
from jax.experimental.pallas import tpu as pltpu


# -------------------- model hyper-parameters (from __init__ defaults) --------------------
SEQ_LEN = 90
IN_CH = 6
HIDDEN_CH = 20
OUT_CH = 6

K1, S1 = 6, 6
K2, S2 = 3, 2
K3, S3 = 3, 2
K4, S4 = 3, 2

L1 = (SEQ_LEN - K1) // S1 + 1          # 15
L2 = (L1 - K2) // S2 + 1               # 7
L3 = (L2 - K3) // S3 + 1               # 3
L4 = (L3 - K4) // S4 + 1               # 1

IN_FEATS = IN_CH * SEQ_LEN             # 540  (kernel input columns, channel-major c*L + p)
F1 = L1 * HIDDEN_CH                    # 300  (position-major p*C + c)
F2 = L2 * HIDDEN_CH                    # 140
F3 = L3 * HIDDEN_CH                    # 60
OUT_FEATS = L4 * OUT_CH                # 6

DEFAULT_BATCH_TILE = 1024              # sweep 512/1024/2048; ~13 MiB working set at 1024


def _round_up(v, m):
    return (v + m - 1) // m * m


# -------------------- kernel --------------------
def activity_cnn_kernel(
    x_ref,
    w1_ref, b1_ref,
    w2_ref, b2_ref,
    w3_ref, b3_ref,
    w4_ref, b4_ref,
    out_ref,
):
    # x_ref: (TB, IN_FEATS) activations — batch on sublanes, flattened (C*L) features on lanes.
    # w*_ref: resident bf16 block-Toeplitz matrices (constant index_map).
    # b*_ref: (1, F) f32 bias rows.  Accumulation / bias / ReLU are f32.
    cd = w1_ref.dtype
    h = x_ref[...].astype(cd)                                   # in-kernel cast: no extra HBM pass
    h = jnp.dot(h, w1_ref[...], preferred_element_type=jnp.float32) + b1_ref[...]
    h = jnp.maximum(h, 0.0).astype(cd)
    h = jnp.dot(h, w2_ref[...], preferred_element_type=jnp.float32) + b2_ref[...]
    h = jnp.maximum(h, 0.0).astype(cd)
    h = jnp.dot(h, w3_ref[...], preferred_element_type=jnp.float32) + b3_ref[...]
    h = jnp.maximum(h, 0.0).astype(cd)
    out_ref[...] = jnp.dot(h, w4_ref[...], preferred_element_type=jnp.float32) + b4_ref[...]


# -------------------- trace-time weight expansion (conv -> dense matmul) --------------------
def _expand_conv_t(w, b, stride, l_in, l_out, channel_major_in, dtype):
    """w: (Cout, Cin, K), b: (Cout,).

    Returns (Wt, brow) with Wt: (l_in*Cin, l_out*Cout), brow: (1, l_out*Cout) such that
        cols_out = cols_in @ Wt + brow
    reproduces the valid, stride-`stride` Conv1d.  Input column order is channel-major
    (c*l_in + p) when channel_major_in (raw x flatten), otherwise position-major (p*Cin + c).
    Output column order is always position-major (t*Cout + c).
    """
    cout, cin, k = w.shape
    w32 = w.astype(jnp.float32)
    if channel_major_in:
        wf = jnp.zeros((l_out * cout, cin, l_in), jnp.float32)
        for t in range(l_out):                                   # tiny trace-time loop
            wf = wf.at[t * cout:(t + 1) * cout, :, t * stride:t * stride + k].set(w32)
    else:
        w_kc = jnp.transpose(w32, (0, 2, 1))                     # (Cout, K, Cin)
        wf = jnp.zeros((l_out * cout, l_in, cin), jnp.float32)
        for t in range(l_out):
            wf = wf.at[t * cout:(t + 1) * cout, t * stride:t * stride + k, :].set(w_kc)
    wt = wf.reshape(l_out * cout, l_in * cin).T.astype(dtype)    # (rows_in, rows_out)
    brow = jnp.tile(b.astype(jnp.float32).reshape(1, cout), (1, l_out))
    return wt, brow


# -------------------- working-set estimate for vmem_limit_bytes --------------------
def _vmem_bytes_estimate(tb, x_itemsize, w_itemsize):
    lane, sub = 128, 8
    feats = (F1, F2, F3, OUT_FEATS)
    x_blk = _round_up(tb, sub) * _round_up(IN_FEATS, lane) * x_itemsize * 2    # double-buffered
    o_blk = _round_up(tb, sub) * _round_up(OUT_FEATS, lane) * 4 * 2
    w_dims = ((IN_FEATS, F1), (F1, F2), (F2, F3), (F3, OUT_FEATS))
    w_b = sum(_round_up(r, sub) * _round_up(c, lane) * w_itemsize for r, c in w_dims) * 2
    b_b = sum(sub * _round_up(c, lane) * 4 for c in feats) * 2
    inter = _round_up(tb, sub) * sum(_round_up(c, lane) for c in feats) * (4 + w_itemsize)
    return x_blk + o_blk + w_b + b_b + inter


# -------------------- wrapper --------------------
def activity_cnn_forward(x, params, batch_tile=DEFAULT_BATCH_TILE,
                         compute_dtype=jnp.bfloat16):
    """x: (B, IN_CH, SEQ_LEN) (f32 or bf16) -> (B, OUT_CH, L4), matching PyTorch NCW layout."""
    (w1, b1, w2, b2, w3, b3, w4, b4) = params
    B = x.shape[0]
    batch_tile = max(8, _round_up(batch_tile, 8))

    # Hoisted (trace-time) conv -> dense matmul expansion; weights cast to bf16 here.
    w1t, b1r = _expand_conv_t(w1, b1, S1, SEQ_LEN, L1, True, compute_dtype)
    w2t, b2r = _expand_conv_t(w2, b2, S2, L1, L2, False, compute_dtype)
    w3t, b3r = _expand_conv_t(w3, b3, S3, L2, L3, False, compute_dtype)
    w4t, b4r = _expand_conv_t(w4, b4, S4, L3, L4, False, compute_dtype)

    # Free, contiguous flatten (no transpose, no extra HBM pass): (B, C, L) -> (B, C*L).
    x2 = x.reshape(B, IN_FEATS)

    # Batch tile: sublane-aligned (x8), capped at batch_tile, and split so the grid has >=2
    # "parallel" steps whenever possible (both v7x TensorCores get work).
    tb = min(batch_tile, max(8, _round_up((B + 1) // 2, 8)))
    bp = _round_up(B, tb)
    if bp != B:
        # Only remainder rows are padded (zeros); no full relayout of x.
        x2 = jnp.pad(x2, ((0, bp - B), (0, 0)))

    vmem_limit = _vmem_bytes_estimate(tb, x2.dtype.itemsize, jnp.dtype(compute_dtype).itemsize)
    vmem_limit = max(16 << 20, min(int(vmem_limit * 1.4) + (1 << 20), 48 << 20))

    def batch_spec(cols):
        return pl.BlockSpec((tb, cols), lambda i: (i, 0))

    def resident_spec(arr):
        # Constant index_map: DMA'd once, stays resident across grid steps.
        return pl.BlockSpec(arr.shape, lambda i: (0, 0))

    out2 = pl.pallas_call(
        activity_cnn_kernel,
        out_shape=jax.ShapeDtypeStruct((bp, OUT_FEATS), jnp.float32),
        grid=(bp // tb,),
        in_specs=[
            batch_spec(IN_FEATS),
            resident_spec(w1t), resident_spec(b1r),
            resident_spec(w2t), resident_spec(b2r),
            resident_spec(w3t), resident_spec(b3r),
            resident_spec(w4t), resident_spec(b4r),
        ],
        out_specs=batch_spec(OUT_FEATS),
        compiler_params=pltpu.CompilerParams(
            dimension_semantics=("parallel",),
            vmem_limit_bytes=vmem_limit,
        ),
    )(x2, w1t, b1r, w2t, b2r, w3t, b3r, w4t, b4r)

    # (B, L4*OUT_CH) position-major -> (B, OUT_CH, L4); tiny.
    return out2[:B].reshape(B, L4, OUT_CH).transpose(0, 2, 1)


# -------------------- parameter init (PyTorch-like uniform fan-in scaling) --------------------
def init_params(key):
    def conv_params(k, cout, cin, ksize):
        k_w, k_b = jax.random.split(k)
        bound = 1.0 / np.sqrt(cin * ksize)
        w = jax.random.uniform(k_w, (cout, cin, ksize), jnp.float32, -bound, bound)
        b = jax.random.uniform(k_b, (cout,), jnp.float32, -bound, bound)
        return w, b

    k1, k2, k3, k4 = jax.random.split(key, 4)
    w1, b1 = conv_params(k1, HIDDEN_CH, IN_CH, K1)
    w2, b2 = conv_params(k2, HIDDEN_CH, HIDDEN_CH, K2)
    w3, b3 = conv_params(k3, HIDDEN_CH, HIDDEN_CH, K3)
    w4, b4 = conv_params(k4, OUT_CH, HIDDEN_CH, K4)
    return (w1, b1, w2, b2, w3, b3, w4, b4)


# -------------------- pure-JAX reference for validation --------------------
def _ref_conv1d(x, w, b, stride):
    out = jax.lax.conv_general_dilated(
        x, w, window_strides=(stride,), padding="VALID",
        dimension_numbers=("NCH", "OIH", "NCH"),
    )
    return out + b.reshape(1, -1, 1)


def activity_cnn_ref(x, params):
    (w1, b1, w2, b2, w3, b3, w4, b4) = params
    h = jnp.maximum(_ref_conv1d(x, w1, b1, S1), 0.0)
    h = jnp.maximum(_ref_conv1d(h, w2, b2, S2), 0.0)
    h = jnp.maximum(_ref_conv1d(h, w3, b3, S3), 0.0)
    return _ref_conv1d(h, w4, b4, S4)


if __name__ == "__main__":
    key = jax.random.PRNGKey(0)
    k_x, k_x2, k_p = jax.random.split(key, 3)
    params = init_params(k_p)
    fwd = jax.jit(activity_cnn_forward)

    # Small test: single grid step (batch padded to one 8-row sublane tile).
    B = 2
    x = jax.random.normal(k_x, (B, IN_CH, SEQ_LEN), jnp.float32)
    out = jax.block_until_ready(fwd(x, params))
    ref = jax.block_until_ready(activity_cnn_ref(x, params))
    assert out.shape == (B, OUT_CH, L4), out.shape
    np.testing.assert_allclose(np.asarray(out), np.asarray(ref), rtol=3e-2, atol=3e-2)

    # Larger test: 2-step "parallel" batch grid + remainder-padding path (bf16 matmuls).
    B2 = 300
    x_big = jax.random.normal(k_x2, (B2, IN_CH, SEQ_LEN), jnp.float32)
    out_big = jax.block_until_ready(fwd(x_big, params))
    ref_big = jax.block_until_ready(activity_cnn_ref(x_big, params))
    assert out_big.shape == (B2, OUT_CH, L4), out_big.shape
    np.testing.assert_allclose(np.asarray(out_big), np.asarray(ref_big), rtol=3e-2, atol=3e-2)

    print("KERNEL_OK")
</pallas_src>

<mosaic_0001>
module attributes {stable_mosaic.version = 11 : i64} {
  func.func @activity_cnn_kernel(%arg0: i32, %arg1: memref<8x540xf32, #tpu.memory_space<vmem>>, %arg2: memref<540x300xbf16, #tpu.memory_space<vmem>>, %arg3: memref<1x300xf32, #tpu.memory_space<vmem>>, %arg4: memref<300x140xbf16, #tpu.memory_space<vmem>>, %arg5: memref<1x140xf32, #tpu.memory_space<vmem>>, %arg6: memref<140x60xbf16, #tpu.memory_space<vmem>>, %arg7: memref<1x60xf32, #tpu.memory_space<vmem>>, %arg8: memref<60x6xbf16, #tpu.memory_space<vmem>>, %arg9: memref<1x6xf32, #tpu.memory_space<vmem>>, %arg10: memref<8x6xf32, #tpu.memory_space<vmem>>) attributes {dimension_semantics = [#tpu.dimension_semantics<parallel>], iteration_bounds = array<i64: 1>, scalar_prefetch = 0 : i64, scratch_operands = 0 : i64, tpu.core_type = #tpu.core_type<tc>, window_params = [{transform_indices = @transform_0, window_bounds = array<i64: 8, 540>}, {pipeline_mode = #tpu.pipeline_mode<synchronous>, transform_indices = @transform_1, window_bounds = array<i64: 540, 300>}, {pipeline_mode = #tpu.pipeline_mode<synchronous>, transform_indices = @transform_2, window_bounds = array<i64: 1, 300>}, {pipeline_mode = #tpu.pipeline_mode<synchronous>, transform_indices = @transform_3, window_bounds = array<i64: 300, 140>}, {pipeline_mode = #tpu.pipeline_mode<synchronous>, transform_indices = @transform_4, window_bounds = array<i64: 1, 140>}, {pipeline_mode = #tpu.pipeline_mode<synchronous>, transform_indices = @transform_5, window_bounds = array<i64: 140, 60>}, {pipeline_mode = #tpu.pipeline_mode<synchronous>, transform_indices = @transform_6, window_bounds = array<i64: 1, 60>}, {pipeline_mode = #tpu.pipeline_mode<synchronous>, transform_indices = @transform_7, window_bounds = array<i64: 60, 6>}, {pipeline_mode = #tpu.pipeline_mode<synchronous>, transform_indices = @transform_8, window_bounds = array<i64: 1, 6>}, {transform_indices = @transform_9, window_bounds = array<i64: 8, 6>}]} {
    %c0 = arith.constant 0 : index
    %c0_0 = arith.constant 0 : index
    %0 = vector.load %arg1[%c0, %c0_0] : memref<8x540xf32, #tpu.memory_space<vmem>>, vector<8x540xf32>
    %1 = arith.truncf %0 : vector<8x540xf32> to vector<8x540xbf16>
    %c0_1 = arith.constant 0 : index
    %c0_2 = arith.constant 0 : index
    %2 = vector.load %arg2[%c0_1, %c0_2] : memref<540x300xbf16, #tpu.memory_space<vmem>>, vector<540x300xbf16>
    %cst = arith.constant dense<0.000000e+00> : vector<8x300xf32>
    %3 = tpu.matmul %1, %2, %cst {dimension_numbers = #tpu.dot_dimension_numbers<[1], [0], [0], [1], [0, 0, 1, 1], [], []>} : vector<8x540xbf16>, vector<540x300xbf16>, vector<8x300xf32> -> vector<8x300xf32>
    %c0_3 = arith.constant 0 : index
    %c0_4 = arith.constant 0 : index
    %4 = vector.load %arg3[%c0_3, %c0_4] : memref<1x300xf32, #tpu.memory_space<vmem>>, vector<1x300xf32>
    %5 = vector.broadcast %4 : vector<1x300xf32> to vector<8x300xf32>
    %6 = arith.addf %3, %5 : vector<8x300xf32>
    %cst_5 = arith.constant 0.000000e+00 : f32
    %7 = vector.broadcast %cst_5 : f32 to vector<8x300xf32>
    %8 = arith.maximumf %6, %7 : vector<8x300xf32>
    %9 = arith.truncf %8 : vector<8x300xf32> to vector<8x300xbf16>
    %c0_6 = arith.constant 0 : index
    %c0_7 = arith.constant 0 : index
    %10 = vector.load %arg4[%c0_6, %c0_7] : memref<300x140xbf16, #tpu.memory_space<vmem>>, vector<300x140xbf16>
    %cst_8 = arith.constant dense<0.000000e+00> : vector<8x140xf32>
    %11 = tpu.matmul %9, %10, %cst_8 {dimension_numbers = #tpu.dot_dimension_numbers<[1], [0], [0], [1], [0, 0, 1, 1], [], []>} : vector<8x300xbf16>, vector<300x140xbf16>, vector<8x140xf32> -> vector<8x140xf32>
    %c0_9 = arith.constant 0 : index
    %c0_10 = arith.constant 0 : index
    %12 = vector.load %arg5[%c0_9, %c0_10] : memref<1x140xf32, #tpu.memory_space<vmem>>, vector<1x140xf32>
    %13 = vector.broadcast %12 : vector<1x140xf32> to vector<8x140xf32>
    %14 = arith.addf %11, %13 : vector<8x140xf32>
    %cst_11 = arith.constant 0.000000e+00 : f32
    %15 = vector.broadcast %cst_11 : f32 to vector<8x140xf32>
    %16 = arith.maximumf %14, %15 : vector<8x140xf32>
    %17 = arith.truncf %16 : vector<8x140xf32> to vector<8x140xbf16>
    %c0_12 = arith.constant 0 : index
    %c0_13 = arith.constant 0 : index
    %18 = vector.load %arg6[%c0_12, %c0_13] : memref<140x60xbf16, #tpu.memory_space<vmem>>, vector<140x60xbf16>
    %cst_14 = arith.constant dense<0.000000e+00> : vector<8x60xf32>
    %19 = tpu.matmul %17, %18, %cst_14 {dimension_numbers = #tpu.dot_dimension_numbers<[1], [0], [0], [1], [0, 0, 1, 1], [], []>} : vector<8x140xbf16>, vector<140x60xbf16>, vector<8x60xf32> -> vector<8x60xf32>
    %c0_15 = arith.constant 0 : index
    %c0_16 = arith.constant 0 : index
    %20 = vector.load %arg7[%c0_15, %c0_16] : memref<1x60xf32, #tpu.memory_space<vmem>>, vector<1x60xf32>
    %21 = vector.broadcast %20 : vector<1x60xf32> to vector<8x60xf32>
    %22 = arith.addf %19, %21 : vector<8x60xf32>
    %cst_17 = arith.constant 0.000000e+00 : f32
    %23 = vector.broadcast %cst_17 : f32 to vector<8x60xf32>
    %24 = arith.maximumf %22, %23 : vector<8x60xf32>
    %25 = arith.truncf %24 : vector<8x60xf32> to vector<8x60xbf16>
    %c0_18 = arith.constant 0 : index
    %c0_19 = arith.constant 0 : index
    %26 = vector.load %arg8[%c0_18, %c0_19] : memref<60x6xbf16, #tpu.memory_space<vmem>>, vector<60x6xbf16>
    %cst_20 = arith.constant dense<0.000000e+00> : vector<8x6xf32>
    %27 = tpu.matmul %25, %26, %cst_20 {dimension_numbers = #tpu.dot_dimension_numbers<[1], [0], [0], [1], [0, 0, 1, 1], [], []>} : vector<8x60xbf16>, vector<60x6xbf16>, vector<8x6xf32> -> vector<8x6xf32>
    %c0_21 = arith.constant 0 : index
    %c0_22 = arith.constant 0 : index
    %28 = vector.load %arg9[%c0_21, %c0_22] : memref<1x6xf32, #tpu.memory_space<vmem>>, vector<1x6xf32>
    %29 = vector.broadcast %28 : vector<1x6xf32> to vector<8x6xf32>
    %30 = arith.addf %27, %29 : vector<8x6xf32>
    %c0_23 = arith.constant 0 : index
    %c0_24 = arith.constant 0 : index
    %31 = vector.load %arg10[%c0_23, %c0_24] : memref<8x6xf32, #tpu.memory_space<vmem>>, vector<8x6xf32>
    tpu.vector_store %arg10[%c0_23, %c0_24], %30 {strides = array<i32>} : memref<8x6xf32, #tpu.memory_space<vmem>>, vector<8x6xf32>,
    return
  }
  func.func @transform_0(%arg0: i32) -> (i32, i32) {
    %c0_i32 = arith.constant 0 : i32
    %c0_i32_0 = arith.constant 0 : i32
    return %arg0, %c0_i32 : i32, i32
  }
  func.func @transform_1(%arg0: i32) -> (i32, i32) {
    %c0_i32 = arith.constant 0 : i32
    %c0_i32_0 = arith.constant 0 : i32
    %c0_i32_1 = arith.constant 0 : i32
    return %c0_i32, %c0_i32_0 : i32, i32
  }
  func.func @transform_2(%arg0: i32) -> (i32, i32) {
    %c0_i32 = arith.constant 0 : i32
    %c0_i32_0 = arith.constant 0 : i32
    %c0_i32_1 = arith.constant 0 : i32
    return %c0_i32, %c0_i32_0 : i32, i32
  }
  func.func @transform_3(%arg0: i32) -> (i32, i32) {
    %c0_i32 = arith.constant 0 : i32
    %c0_i32_0 = arith.constant 0 : i32
    %c0_i32_1 = arith.constant 0 : i32
    return %c0_i32, %c0_i32_0 : i32, i32
  }
  func.func @transform_4(%arg0: i32) -> (i32, i32) {
    %c0_i32 = arith.constant 0 : i32
    %c0_i32_0 = arith.constant 0 : i32
    %c0_i32_1 = arith.constant 0 : i32
    return %c0_i32, %c0_i32_0 : i32, i32
  }
  func.func @transform_5(%arg0: i32) -> (i32, i32) {
    %c0_i32 = arith.constant 0 : i32
    %c0_i32_0 = arith.constant 0 : i32
    %c0_i32_1 = arith.constant 0 : i32
    return %c0_i32, %c0_i32_0 : i32, i32
  }
  func.func @transform_6(%arg0: i32) -> (i32, i32) {
    %c0_i32 = arith.constant 0 : i32
    %c0_i32_0 = arith.constant 0 : i32
    %c0_i32_1 = arith.constant 0 : i32
    return %c0_i32, %c0_i32_0 : i32, i32
  }
  func.func @transform_7(%arg0: i32) -> (i32, i32) {
    %c0_i32 = arith.constant 0 : i32
    %c0_i32_0 = arith.constant 0 : i32
    %c0_i32_1 = arith.constant 0 : i32
    return %c0_i32, %c0_i32_0 : i32, i32
  }
  func.func @transform_8(%arg0: i32) -> (i32, i32) {
    %c0_i32 = arith.constant 0 : i32
    %c0_i32_0 = arith.constant 0 : i32
    %c0_i32_1 = arith.constant 0 : i32
    return %c0_i32, %c0_i32_0 : i32, i32
  }
  func.func @transform_9(%arg0: i32) -> (i32, i32) {
    %c0_i32 = arith.constant 0 : i32
    %c0_i32_0 = arith.constant 0 : i32
    return %arg0, %c0_i32 : i32, i32
  }
}

</mosaic_0001>

<llo_original>
// kernel: activity_cnn_forward.1
$region0: #{activity_cnn_forward.1}
  #allocation0 [shape = 'u32[]', space=smem, size = 0x4, offset = 0x4, fixed_abs, tag = 'smem constant byte address 0x4 - core index']
  #allocation1 [shape = 'u32[72,128]{1,0:T(1,128)}', space=vmem, size = 0x9000, scoped, tag = 'internal scratch']
  %s0 = inlined_call_operand.vmem [shape: f32[8,540], index: 0, kind: input, shape index: {}]
  %s1 = inlined_call_operand.vmem [shape: bf16[540,300], index: 1, kind: input, shape index: {}]
  %s2 = inlined_call_operand.vmem [shape: f32[1,300], index: 2, kind: input, shape index: {}]
  %s3 = inlined_call_operand.vmem [shape: bf16[300,140], index: 3, kind: input, shape index: {}]
  %s4 = inlined_call_operand.vmem [shape: f32[1,140], index: 4, kind: input, shape index: {}]
  %s5 = inlined_call_operand.vmem [shape: bf16[140,60], index: 5, kind: input, shape index: {}]
  %s6 = inlined_call_operand.vmem [shape: f32[1,60], index: 6, kind: input, shape index: {}]
  %s7 = inlined_call_operand.vmem [shape: bf16[60,6], index: 7, kind: input, shape index: {}]
  %s8 = inlined_call_operand.vmem [shape: f32[1,6], index: 8, kind: input, shape index: {}]
  %s9 = inlined_call_operand.vmem [shape: f32[8,6], index: 9, kind: output, shape index: {}]
  %s10 = sld [smem:[#allocation0]]
  $region46: #{activity_cnn_forward.1} parent=0
    _
  %s12 = ssub.s32 1, %s10
  %s13 = scalar_select 0, %s12, %s10
  // Predicated region
  $region2: #{activity_cnn_forward.1} parent=0 // pred_check
    _
  $region3: #{activity_cnn_forward.1} parent=0 // pred_check_branch
    %15 = sbr.rel (0) target = $region5
  $region4: #{activity_cnn_forward.1} parent=0 // pred_region
    _
  $region5: #{activity_cnn_forward.1} parent=0 // pred_fallthru
    _
  // Predicated region
  $region6: #{activity_cnn_forward.1} parent=0 // pred_check
    _
  $region7: #{activity_cnn_forward.1} parent=0 // pred_check_branch
    %17 = sbr.rel (0) target = $region9
  $region8: #{activity_cnn_forward.1} parent=0 // pred_region
    _
  $region9: #{activity_cnn_forward.1} parent=0 // pred_fallthru
    _
  // Predicated region
  $region10: #{activity_cnn_forward.1} parent=0 // pred_check
    _
  $region11: #{activity_cnn_forward.1} parent=0 // pred_check_branch
    %19 = sbr.rel (0) target = $region13
  $region12: #{activity_cnn_forward.1} parent=0 // pred_region
    _
  $region13: #{activity_cnn_forward.1} parent=0 // pred_fallthru
    _
  // Predicated region
  $region14: #{activity_cnn_forward.1} parent=0 // pred_check
    _
  $region15: #{activity_cnn_forward.1} parent=0 // pred_check_branch
    %21 = sbr.rel (0) target = $region17
  $region16: #{activity_cnn_forward.1} parent=0 // pred_region
    _
  $region17: #{activity_cnn_forward.1} parent=0 // pred_fallthru
    _
  // Predicated region
  $region18: #{activity_cnn_forward.1} parent=0 // pred_check
    _
  $region19: #{activity_cnn_forward.1} parent=0 // pred_check_branch
    %23 = sbr.rel (0) target = $region21
  $region20: #{activity_cnn_forward.1} parent=0 // pred_region
    _
  $region21: #{activity_cnn_forward.1} parent=0 // pred_fallthru
    _
  // Predicated region
  $region22: #{activity_cnn_forward.1} parent=0 // pred_check
    _
  $region23: #{activity_cnn_forward.1} parent=0 // pred_check_branch
    %25 = sbr.rel (0) target = $region25
  $region24: #{activity_cnn_forward.1} parent=0 // pred_region
    _
  $region25: #{activity_cnn_forward.1} parent=0 // pred_fallthru
    _
  // Predicated region
  $region26: #{activity_cnn_forward.1} parent=0 // pred_check
    _
  $region27: #{activity_cnn_forward.1} parent=0 // pred_check_branch
    %27 = sbr.rel (0) target = $region29
  $region28: #{activity_cnn_forward.1} parent=0 // pred_region
    _
  $region29: #{activity_cnn_forward.1} parent=0 // pred_fallthru
    _
  // Predicated region
  $region30: #{activity_cnn_forward.1} parent=0 // pred_check
    _
  $region31: #{activity_cnn_forward.1} parent=0 // pred_check_branch
    %29 = sbr.rel (0) target = $region33
  $region32: #{activity_cnn_forward.1} parent=0 // pred_region
    _
  $region33: #{activity_cnn_forward.1} parent=0 // pred_fallthru
    _
  // Predicated region
  $region34: #{activity_cnn_forward.1} parent=0 // pred_check
    _
  $region35: #{activity_cnn_forward.1} parent=0 // pred_check_branch
    %31 = sbr.rel (0) target = $region37
  $region36: #{activity_cnn_forward.1} parent=0 // pred_region
    _
  $region37: #{activity_cnn_forward.1} parent=0 // pred_fallthru
    _
  %v33 = vld [vmem:[%s0] sm:$0xff]
  %v34 = vld [vmem:[%s0 + $0x8] sm:$0xff]
  %v35 = vld [vmem:[%s0 + $0x10] sm:$0xff]
  %v36 = vld [vmem:[%s0 + $0x18] sm:$0xff]
  %v37 = vld [vmem:[%s0 + $0x20] sm:$0xff]
  %v38 = vpack.c.bf16 %v33, %v33
  %v39 = vpack.c.bf16 %v34, %v34
  %v40 = vpack.c.bf16 %v35, %v35
  %v41 = vpack.c.bf16 %v36, %v36
  %v42 = vpack.c.bf16 %v37, %v37
  %v43 = vld [vmem:[%s1] sm:$0xff]
  %v44 = vld [vmem:[%s1 + $0x8] sm:$0xf]
  %v45 = vld [vmem:[%s1 + $0xc] sm:$0xff]
  %v46 = vld [vmem:[%s1 + $0x14] sm:$0xf]
  %v47 = vld [vmem:[%s1 + $0x18] sm:$0xff]
  %v48 = vld [vmem:[%s1 + $0x20] sm:$0xf]
  %v49 = vld [vmem:[%s1 + $0x24] sm:$0xff]
  %v50 = vld [vmem:[%s1 + $0x2c] sm:$0xf]
  %v51 = vld [vmem:[%s1 + $0x30] sm:$0xff]
  %v52 = vld [vmem:[%s1 + $0x38] sm:$0xf]
  %v53 = vld [vmem:[%s1 + $0x3c] sm:$0xff]
  %v54 = vld [vmem:[%s1 + $0x44] sm:$0xf]
  %v55 = vld [vmem:[%s1 + $0x48] sm:$0xff]
  %v56 = vld [vmem:[%s1 + $0x50] sm:$0xf]
  %v57 = vld [vmem:[%s1 + $0x54] sm:$0xff]
  %v58 = vld [vmem:[%s1 + $0x5c] sm:$0xf]
  %v59 = vld [vmem:[%s1 + $0x60] sm:$0xff]
  %v60 = vld [vmem:[%s1 + $0x68] sm:$0xf]
  %v61 = vld [vmem:[%s1 + $0x6c] sm:$0xff]
  %v62 = vld [vmem:[%s1 + $0x74] sm:$0xf]
  %v63 = vld [vmem:[%s1 + $0x78] sm:$0xff]
  %v64 = vld [vmem:[%s1 + $0x80] sm:$0xf]
  %v65 = vld [vmem:[%s1 + $0x84] sm:$0xff]
  %v66 = vld [vmem:[%s1 + $0x8c] sm:$0xf]
  %v67 = vld [vmem:[%s1 + $0x90] sm:$0xff]
  %v68 = vld [vmem:[%s1 + $0x98] sm:$0xf]
  %v69 = vld [vmem:[%s1 + $0x9c] sm:$0xff]
  %v70 = vld [vmem:[%s1 + $0xa4] sm:$0xf]
  %v71 = vld [vmem:[%s1 + $0xa8] sm:$0xff]
  %v72 = vld [vmem:[%s1 + $0xb0] sm:$0xf]
  %v73 = vld [vmem:[%s1 + $0xb4] sm:$0xff]
  %v74 = vld [vmem:[%s1 + $0xbc] sm:$0xf]
  %v75 = vld [vmem:[%s1 + $0xc0] sm:$0xff]
  %v76 = vld [vmem:[%s1 + $0xc8] sm:$0xf]
  %v77 = vld [vmem:[%s1 + $0xcc] sm:$0xff]
  %v78 = vld [vmem:[%s1 + $0xd4] sm:$0xf]
  %v79 = vld [vmem:[%s1 + $0xd8] sm:$0xff]
  %v80 = vld [vmem:[%s1 + $0xe0] sm:$0xf]
  %v81 = vld [vmem:[%s1 + $0xe4] sm:$0xff]
  %v82 = vld [vmem:[%s1 + $0xec] sm:$0xf]
  %v83 = vld [vmem:[%s1 + $0xf0] sm:$0xff]
  %v84 = vld [vmem:[%s1 + $0xf8] sm:$0xf]
  %v85 = vld [vmem:[%s1 + $0xfc] sm:$0xff]
  %v86 = vld [vmem:[%s1 + $0x104] sm:$0xf]
  %v87 = vld [vmem:[%s1 + $0x108] sm:$0xff]
  %v88 = vld [vmem:[%s1 + $0x110] sm:$0xf]
  %v89 = vld [vmem:[%s1 + $0x114] sm:$0xff]
  %v90 = vld [vmem:[%s1 + $0x11c] sm:$0xf]
  %v91 = vld [vmem:[%s1 + $0x120] sm:$0xff]
  %v92 = vld [vmem:[%s1 + $0x128] sm:$0xf]
  %v93 = vld [vmem:[%s1 + $0x12c] sm:$0xff]
  %v94 = vld [vmem:[%s1 + $0x134] sm:$0xf]
  %v95 = vld [vmem:[%s1 + $0x138] sm:$0xff]
  %v96 = vld [vmem:[%s1 + $0x140] sm:$0xf]
  %v97 = vld [vmem:[%s1 + $0x144] sm:$0xff]
  %v98 = vld [vmem:[%s1 + $0x14c] sm:$0xf]
  %v99 = vld [vmem:[%s1 + $0x150] sm:$0xff]
  %v100 = vld [vmem:[%s1 + $0x158] sm:$0xf]
  %v101 = vld [vmem:[%s1 + $0x15c] sm:$0xff]
  %v102 = vld [vmem:[%s1 + $0x164] sm:$0xf]
  %v103 = vld [vmem:[%s1 + $0x168] sm:$0xff]
  %v104 = vld [vmem:[%s1 + $0x170] sm:$0xf]
  %v105 = vld [vmem:[%s1 + $0x174] sm:$0xff]
  %v106 = vld [vmem:[%s1 + $0x17c] sm:$0xf]
  %v107 = vld [vmem:[%s1 + $0x180] sm:$0xff]
  %v108 = vld [vmem:[%s1 + $0x188] sm:$0xf]
  %v109 = vld [vmem:[%s1 + $0x18c] sm:$0xff]
  %v110 = vld [vmem:[%s1 + $0x194] sm:$0xf]
  %v111 = vld [vmem:[%s1 + $0x198] sm:$0xff]
  %v112 = vld [vmem:[%s1 + $0x1a0] sm:$0xf]
  %v113 = vld [vmem:[%s1 + $0x1a4] sm:$0xff]
  %v114 = vld [vmem:[%s1 + $0x1ac] sm:$0xf]
  %v115 = vld [vmem:[%s1 + $0x1b0] sm:$0xff]
  %v116 = vld [vmem:[%s1 + $0x1b8] sm:$0xf]
  %v117 = vld [vmem:[%s1 + $0x1bc] sm:$0xff]
  %v118 = vld [vmem:[%s1 + $0x1c4] sm:$0xf]
  %v119 = vld [vmem:[%s1 + $0x1c8] sm:$0xff]
  %v120 = vld [vmem:[%s1 + $0x1d0] sm:$0xf]
  %v121 = vld [vmem:[%s1 + $0x1d4] sm:$0xff]
  %v122 = vld [vmem:[%s1 + $0x1dc] sm:$0xf]
  %v123 = vld [vmem:[%s1 + $0x1e0] sm:$0xff]
  %v124 = vld [vmem:[%s1 + $0x1e8] sm:$0xf]
  %v125 = vld [vmem:[%s1 + $0x1ec] sm:$0xff]
  %v126 = vld [vmem:[%s1 + $0x1f4] sm:$0xf]
  %v127 = vld [vmem:[%s1 + $0x1f8] sm:$0xff]
  %v128 = vld [vmem:[%s1 + $0x200] sm:$0xf]
  %v129 = vld [vmem:[%s1 + $0x204] sm:$0xff]
  %v130 = vld [vmem:[%s1 + $0x20c] sm:$0xf]
  %v131 = vld [vmem:[%s1 + $0x210] sm:$0xff]
  %v132 = vld [vmem:[%s1 + $0x218] sm:$0xf]
  %v133 = vld [vmem:[%s1 + $0x21c] sm:$0xff]
  %v134 = vld [vmem:[%s1 + $0x224] sm:$0xf]
  %v135 = vld [vmem:[%s1 + $0x228] sm:$0xff]
  %v136 = vld [vmem:[%s1 + $0x230] sm:$0xf]
  %v137 = vld [vmem:[%s1 + $0x234] sm:$0xff]
  %v138 = vld [vmem:[%s1 + $0x23c] sm:$0xf]
  %v139 = vld [vmem:[%s1 + $0x240] sm:$0xff]
  %v140 = vld [vmem:[%s1 + $0x248] sm:$0xf]
  %v141 = vld [vmem:[%s1 + $0x24c] sm:$0xff]
  %v142 = vld [vmem:[%s1 + $0x254] sm:$0xf]
  %v143 = vld [vmem:[%s1 + $0x258] sm:$0xff]
  %v144 = vld [vmem:[%s1 + $0x260] sm:$0xf]
  %v145 = vld [vmem:[%s1 + $0x264] sm:$0xff]
  %v146 = vld [vmem:[%s1 + $0x26c] sm:$0xf]
  %v147 = vld [vmem:[%s1 + $0x270] sm:$0xff]
  %v148 = vld [vmem:[%s1 + $0x278] sm:$0xf]
  %v149 = vld [vmem:[%s1 + $0x27c] sm:$0xff]
  %v150 = vld [vmem:[%s1 + $0x284] sm:$0xf]
  %v151 = vld [vmem:[%s1 + $0x288] sm:$0xff]
  %v152 = vld [vmem:[%s1 + $0x290] sm:$0xf]
  %v153 = vld [vmem:[%s1 + $0x294] sm:$0xff]
  %v154 = vld [vmem:[%s1 + $0x29c] sm:$0xf]
  %v155 = vld [vmem:[%s1 + $0x2a0] sm:$0xff]
  %v156 = vld [vmem:[%s1 + $0x2a8] sm:$0xf]
  %v157 = vld [vmem:[%s1 + $0x2ac] sm:$0xff]
  %v158 = vld [vmem:[%s1 + $0x2b4] sm:$0xf]
  %v159 = vld [vmem:[%s1 + $0x2b8] sm:$0xff]
  %v160 = vld [vmem:[%s1 + $0x2c0] sm:$0xf]
  %v161 = vld [vmem:[%s1 + $0x2c4] sm:$0xff]
  %v162 = vld [vmem:[%s1 + $0x2cc] sm:$0xf]
  %v163 = vld [vmem:[%s1 + $0x2d0] sm:$0xff]
  %v164 = vld [vmem:[%s1 + $0x2d8] sm:$0xf]
  %v165 = vld [vmem:[%s1 + $0x2dc] sm:$0xff]
  %v166 = vld [vmem:[%s1 + $0x2e4] sm:$0xf]
  %v167 = vld [vmem:[%s1 + $0x2e8] sm:$0xff]
  %v168 = vld [vmem:[%s1 + $0x2f0] sm:$0xf]
  %v169 = vld [vmem:[%s1 + $0x2f4] sm:$0xff]
  %v170 = vld [vmem:[%s1 + $0x2fc] sm:$0xf]
  %v171 = vld [vmem:[%s1 + $0x300] sm:$0xff]
  %v172 = vld [vmem:[%s1 + $0x308] sm:$0xf]
  %v173 = vld [vmem:[%s1 + $0x30c] sm:$0xff]
  %v174 = vld [vmem:[%s1 + $0x314] sm:$0xf]
  %v175 = vld [vmem:[%s1 + $0x318] sm:$0xff]
  %v176 = vld [vmem:[%s1 + $0x320] sm:$0xf]
  %v177 = vld [vmem:[%s1 + $0x324] sm:$0x33]
  %v178 = vld [vmem:[%s1 + $0x32c] sm:$0x3]
  %v179 = vld [vmem:[%s2] sm:$0x7]
  %v181 = vperm.slane %v179, 0
  %v182 = vperm.slane %v179, 1
  %v183 = vperm.slane %v179, 2
  %v323 = vunpack.c.l.b16 %v43
  %v324 = vunpack.c.h.b16 %v43
  %v325 = vunpack.c.l.b16 %v44
  %v326 = vunpack.c.l.b16 %v45
  %v327 = vunpack.c.h.b16 %v45
  %v328 = vunpack.c.l.b16 %v46
  %v329 = vunpack.c.l.b16 %v47
  %v330 = vunpack.c.h.b16 %v47
  %v331 = vunpack.c.l.b16 %v48
  %v332 = vunpack.c.l.b16 %v49
  %v333 = vunpack.c.h.b16 %v49
  %v334 = vunpack.c.l.b16 %v50
  %v335 = vunpack.c.l.b16 %v51
  %v336 = vunpack.c.h.b16 %v51
  %v337 = vunpack.c.l.b16 %v52
  %v338 = vunpack.c.l.b16 %v53
  %v339 = vunpack.c.h.b16 %v53
  %v340 = vunpack.c.l.b16 %v54
  %v341 = vunpack.c.l.b16 %v55
  %v342 = vunpack.c.h.b16 %v55
  %v343 = vunpack.c.l.b16 %v56
  %v344 = vunpack.c.l.b16 %v57
  %v345 = vunpack.c.h.b16 %v57
  %v346 = vunpack.c.l.b16 %v58
  %v347 = vunpack.c.l.b16 %v59
  %v348 = vunpack.c.h.b16 %v59
  %v349 = vunpack.c.l.b16 %v60
  %v350 = vunpack.c.l.b16 %v61
  %v351 = vunpack.c.h.b16 %v61
  %v352 = vunpack.c.l.b16 %v62
  %v353 = vunpack.c.l.b16 %v63
  %v354 = vunpack.c.h.b16 %v63
  %v355 = vunpack.c.l.b16 %v64
  %v356 = vunpack.c.l.b16 %v65
  %v357 = vunpack.c.h.b16 %v65
  %v358 = vunpack.c.l.b16 %v66
  %v359 = vunpack.c.l.b16 %v67
  %v360 = vunpack.c.h.b16 %v67
  %v361 = vunpack.c.l.b16 %v68
  %v362 = vunpack.c.l.b16 %v69
  %v363 = vunpack.c.h.b16 %v69
  %v364 = vunpack.c.l.b16 %v70
  %v365 = vunpack.c.l.b16 %v71
  %v366 = vunpack.c.h.b16 %v71
  %v367 = vunpack.c.l.b16 %v72
  %v368 = vunpack.c.l.b16 %v73
  %v369 = vunpack.c.h.b16 %v73
  %v370 = vunpack.c.l.b16 %v74
  %v371 = vunpack.c.l.b16 %v75
  %v372 = vunpack.c.h.b16 %v75
  %v373 = vunpack.c.l.b16 %v76
  %v374 = vunpack.c.l.b16 %v77
  %v375 = vunpack.c.h.b16 %v77
  %v376 = vunpack.c.l.b16 %v78
  %v377 = vunpack.c.l.b16 %v79
  %v378 = vunpack.c.h.b16 %v79
  %v379 = vunpack.c.l.b16 %v80
  %v380 = vunpack.c.l.b16 %v81
  %v381 = vunpack.c.h.b16 %v81
  %v382 = vunpack.c.l.b16 %v82
  %v383 = vunpack.c.l.b16 %v83
  %v384 = vunpack.c.h.b16 %v83
  %v385 = vunpack.c.l.b16 %v84
  %v386 = vunpack.c.l.b16 %v85
  %v387 = vunpack.c.h.b16 %v85
  %v388 = vunpack.c.l.b16 %v86
  %v389 = vunpack.c.l.b16 %v87
  %v390 = vunpack.c.h.b16 %v87
  %v391 = vunpack.c.l.b16 %v88
  %v392 = vunpack.c.l.b16 %v89
  %v393 = vunpack.c.h.b16 %v89
  %v394 = vunpack.c.l.b16 %v90
  %v395 = vunpack.c.l.b16 %v91
  %v396 = vunpack.c.h.b16 %v91
  %v397 = vunpack.c.l.b16 %v92
  %v398 = vunpack.c.l.b16 %v93
  %v399 = vunpack.c.h.b16 %v93
  %v400 = vunpack.c.l.b16 %v94
  %v401 = vunpack.c.l.b16 %v95
  %v402 = vunpack.c.h.b16 %v95
  %v403 = vunpack.c.l.b16 %v96
  %v404 = vunpack.c.l.b16 %v97
  %v405 = vunpack.c.h.b16 %v97
  %v406 = vunpack.c.l.b16 %v98
  %v407 = vunpack.c.l.b16 %v99
  %v408 = vunpack.c.h.b16 %v99
  %v409 = vunpack.c.l.b16 %v100
  %v410 = vunpack.c.l.b16 %v101
  %v411 = vunpack.c.h.b16 %v101
  %v412 = vunpack.c.l.b16 %v102
  %v413 = vunpack.c.l.b16 %v103
  %v414 = vunpack.c.h.b16 %v103
  %v415 = vunpack.c.l.b16 %v104
  %v416 = vunpack.c.l.b16 %v105
  %v417 = vunpack.c.h.b16 %v105
  %v418 = vunpack.c.l.b16 %v106
  %v419 = vunpack.c.l.b16 %v107
  %v420 = vunpack.c.h.b16 %v107
  %v421 = vunpack.c.l.b16 %v108
  %v422 = vunpack.c.l.b16 %v109
  %v423 = vunpack.c.h.b16 %v109
  %v424 = vunpack.c.l.b16 %v110
  %v425 = vunpack.c.l.b16 %v111
  %v426 = vunpack.c.h.b16 %v111
  %v427 = vunpack.c.l.b16 %v112
  %v428 = vunpack.c.l.b16 %v113
  %v429 = vunpack.c.h.b16 %v113
  %v430 = vunpack.c.l.b16 %v114
  %v431 = vunpack.c.l.b16 %v115
  %v432 = vunpack.c.h.b16 %v115
  %v433 = vunpack.c.l.b16 %v116
  %v434 = vunpack.c.l.b16 %v117
  %v435 = vunpack.c.h.b16 %v117
  %v436 = vunpack.c.l.b16 %v118
  %v437 = vunpack.c.l.b16 %v119
  %v438 = vunpack.c.h.b16 %v119
  %v439 = vunpack.c.l.b16 %v120
  %v440 = vunpack.c.l.b16 %v121
  %v441 = vunpack.c.h.b16 %v121
  %v442 = vunpack.c.l.b16 %v122
  %v443 = vunpack.c.l.b16 %v123
  %v444 = vunpack.c.h.b16 %v123
  %v445 = vunpack.c.l.b16 %v124
  %v446 = vunpack.c.l.b16 %v125
  %v447 = vunpack.c.h.b16 %v125
  %v448 = vunpack.c.l.b16 %v126
  %v449 = vunpack.c.l.b16 %v127
  %v450 = vunpack.c.h.b16 %v127
  %v451 = vunpack.c.l.b16 %v128
  %v452 = vunpack.c.l.b16 %v129
  %v453 = vunpack.c.h.b16 %v129
  %v454 = vunpack.c.l.b16 %v130
  %v455 = vunpack.c.l.b16 %v131
  %v456 = vunpack.c.h.b16 %v131
  %v457 = vunpack.c.l.b16 %v132
  %v458 = vunpack.c.l.b16 %v133
  %v459 = vunpack.c.h.b16 %v133
  %v460 = vunpack.c.l.b16 %v134
  %v461 = vunpack.c.l.b16 %v135
  %v462 = vunpack.c.h.b16 %v135
  %v463 = vunpack.c.l.b16 %v136
  %v464 = vunpack.c.l.b16 %v137
  %v465 = vunpack.c.h.b16 %v137
  %v466 = vunpack.c.l.b16 %v138
  %v467 = vunpack.c.l.b16 %v139
  %v468 = vunpack.c.h.b16 %v139
  %v469 = vunpack.c.l.b16 %v140
  %v470 = vunpack.c.l.b16 %v141
  %v471 = vunpack.c.h.b16 %v141
  %v472 = vunpack.c.l.b16 %v142
  %v473 = vunpack.c.l.b16 %v143
  %v474 = vunpack.c.h.b16 %v143
  %v475 = vunpack.c.l.b16 %v144
  %v476 = vunpack.c.l.b16 %v145
  %v477 = vunpack.c.h.b16 %v145
  %v478 = vunpack.c.l.b16 %v146
  %v479 = vunpack.c.l.b16 %v147
  %v480 = vunpack.c.h.b16 %v147
  %v481 = vunpack.c.l.b16 %v148
  %v482 = vunpack.c.l.b16 %v149
  %v483 = vunpack.c.h.b16 %v149
  %v484 = vunpack.c.l.b16 %v150
  %v485 = vunpack.c.l.b16 %v151
  %v486 = vunpack.c.h.b16 %v151
  %v487 = vunpack.c.l.b16 %v152
  %v488 = vunpack.c.l.b16 %v153
  %v489 = vunpack.c.h.b16 %v153
  %v490 = vunpack.c.l.b16 %v154
  %v491 = vunpack.c.l.b16 %v155
  %v492 = vunpack.c.h.b16 %v155
  %v493 = vunpack.c.l.b16 %v156
  %v494 = vunpack.c.l.b16 %v157
  %v495 = vunpack.c.h.b16 %v157
  %v496 = vunpack.c.l.b16 %v158
  %v497 = vunpack.c.l.b16 %v159
  %v498 = vunpack.c.h.b16 %v159
  %v499 = vunpack.c.l.b16 %v160
  %v500 = vunpack.c.l.b16 %v161
  %v501 = vunpack.c.h.b16 %v161
  %v502 = vunpack.c.l.b16 %v162
  %v503 = vunpack.c.l.b16 %v163
  %v504 = vunpack.c.h.b16 %v163
  %v505 = vunpack.c.l.b16 %v164
  %v506 = vunpack.c.l.b16 %v165
  %v507 = vunpack.c.h.b16 %v165
  %v508 = vunpack.c.l.b16 %v166
  %v509 = vunpack.c.l.b16 %v167
  %v510 = vunpack.c.h.b16 %v167
  %v511 = vunpack.c.l.b16 %v168
  %v512 = vunpack.c.l.b16 %v169
  %v513 = vunpack.c.h.b16 %v169
  %v514 = vunpack.c.l.b16 %v170
  %v515 = vunpack.c.l.b16 %v171
  %v516 = vunpack.c.h.b16 %v171
  %v517 = vunpack.c.l.b16 %v172
  %v518 = vunpack.c.l.b16 %v173
  %v519 = vunpack.c.h.b16 %v173
  %v520 = vunpack.c.l.b16 %v174
  %v521 = vunpack.c.l.b16 %v175
  %v522 = vunpack.c.h.b16 %v175
  %v523 = vunpack.c.l.b16 %v176
  %v524 = vunpack.c.l.b16 %v177
  %v525 = vunpack.c.h.b16 %v177
  %v526 = vunpack.c.l.b16 %v178
  %v527 = vpack.c.b16 %v326, %v323
  %v528 = vpack.c.b16 %v327, %v324
  %v529 = vpack.c.b16 %v328, %v325
  %v530 = vpack.c.b16 %v332, %v329
  %v531 = vpack.c.b16 %v333, %v330
  %v532 = vpack.c.b16 %v334, %v331
  %v533 = vpack.c.b16 %v338, %v335
  %v534 = vpack.c.b16 %v339, %v336
  %v535 = vpack.c.b16 %v340, %v337
  %v536 = vpack.c.b16 %v344, %v341
  %v537 = vpack.c.b16 %v345, %v342
  %v538 = vpack.c.b16 %v346, %v343
  %v539 = vpack.c.b16 %v350, %v347
  %v540 = vpack.c.b16 %v351, %v348
  %v541 = vpack.c.b16 %v352, %v349
  %v542 = vpack.c.b16 %v356, %v353
  %v543 = vpack.c.b16 %v357, %v354
  %v544 = vpack.c.b16 %v358, %v355
  %v545 = vpack.c.b16 %v362, %v359
  %v546 = vpack.c.b16 %v363, %v360
  %v547 = vpack.c.b16 %v364, %v361
  %v548 = vpack.c.b16 %v368, %v365
  %v549 = vpack.c.b16 %v369, %v366
  %v550 = vpack.c.b16 %v370, %v367
  %v551 = vpack.c.b16 %v374, %v371
  %v552 = vpack.c.b16 %v375, %v372
  %v553 = vpack.c.b16 %v376, %v373
  %v554 = vpack.c.b16 %v380, %v377
  %v555 = vpack.c.b16 %v381, %v378
  %v556 = vpack.c.b16 %v382, %v379
  %v557 = vpack.c.b16 %v386, %v383
  %v558 = vpack.c.b16 %v387, %v384
  %v559 = vpack.c.b16 %v388, %v385
  %v560 = vpack.c.b16 %v392, %v389
  %v561 = vpack.c.b16 %v393, %v390
  %v562 = vpack.c.b16 %v394, %v391
  %v563 = vpack.c.b16 %v398, %v395
  %v564 = vpack.c.b16 %v399, %v396
  %v565 = vpack.c.b16 %v400, %v397
  %v566 = vpack.c.b16 %v404, %v401
  %v567 = vpack.c.b16 %v405, %v402
  %v568 = vpack.c.b16 %v406, %v403
  %v569 = vpack.c.b16 %v410, %v407
  %v570 = vpack.c.b16 %v411, %v408
  %v571 = vpack.c.b16 %v412, %v409
  %v572 = vpack.c.b16 %v416, %v413
  %v573 = vpack.c.b16 %v417, %v414
  %v574 = vpack.c.b16 %v418, %v415
  %v575 = vpack.c.b16 %v422, %v419
  %v576 = vpack.c.b16 %v423, %v420
  %v577 = vpack.c.b16 %v424, %v421
  %v578 = vpack.c.b16 %v428, %v425
  %v579 = vpack.c.b16 %v429, %v426
  %v580 = vpack.c.b16 %v430, %v427
  %v581 = vpack.c.b16 %v434, %v431
  %v582 = vpack.c.b16 %v435, %v432
  %v583 = vpack.c.b16 %v436, %v433
  %v584 = vpack.c.b16 %v440, %v437
  %v585 = vpack.c.b16 %v441, %v438
  %v586 = vpack.c.b16 %v442, %v439
  %v587 = vpack.c.b16 %v446, %v443
  %v588 = vpack.c.b16 %v447, %v444
  %v589 = vpack.c.b16 %v448, %v445
  %v590 = vpack.c.b16 %v452, %v449
  %v591 = vpack.c.b16 %v453, %v450
  %v592 = vpack.c.b16 %v454, %v451
  %v593 = vpack.c.b16 %v458, %v455
  %v594 = vpack.c.b16 %v459, %v456
  %v595 = vpack.c.b16 %v460, %v457
  %v596 = vpack.c.b16 %v464, %v461
  %v597 = vpack.c.b16 %v465, %v462
  %v598 = vpack.c.b16 %v466, %v463
  %v599 = vpack.c.b16 %v470, %v467
  %v600 = vpack.c.b16 %v471, %v468
  %v601 = vpack.c.b16 %v472, %v469
  %v602 = vpack.c.b16 %v476, %v473
  %v603 = vpack.c.b16 %v477, %v474
  %v604 = vpack.c.b16 %v478, %v475
  %v605 = vpack.c.b16 %v482, %v479
  %v606 = vpack.c.b16 %v483, %v480
  %v607 = vpack.c.b16 %v484, %v481
  %v608 = vpack.c.b16 %v488, %v485
  %v609 = vpack.c.b16 %v489, %v486
  %v610 = vpack.c.b16 %v490, %v487
  %v611 = vpack.c.b16 %v494, %v491
  %v612 = vpack.c.b16 %v495, %v492
  %v613 = vpack.c.b16 %v496, %v493
  %v614 = vpack.c.b16 %v500, %v497
  %v615 = vpack.c.b16 %v501, %v498
  %v616 = vpack.c.b16 %v502, %v499
  %v617 = vpack.c.b16 %v506, %v503
  %v618 = vpack.c.b16 %v507, %v504
  %v619 = vpack.c.b16 %v508, %v505
  %v620 = vpack.c.b16 %v512, %v509
  %v621 = vpack.c.b16 %v513, %v510
  %v622 = vpack.c.b16 %v514, %v511
  %v623 = vpack.c.b16 %v518, %v515
  %v624 = vpack.c.b16 %v519, %v516
  %v625 = vpack.c.b16 %v520, %v517
  %v626 = vpack.c.b16 %v524, %v521
  %v627 = vpack.c.b16 %v525, %v522
  %v628 = vpack.c.b16 %v526, %v523
  %vm728 = vcmask 228352
  %v730 = vsel %vm728, %v42, 0
  %vm732 = vcmask 1045504
  %v734 = vsel %vm732, %v626, 0
  %v737 = vsel %vm732, %v627, 0
  %v740 = vsel %vm732, %v628, 0
  %742 = vmatpush.bf16.msra.mxu0 %v548
  %743 = vmatpush.bf16.msra.mxu0 %v545
  %744 = vmatpush.bf16.msra.mxu0 %v542
  %745 = vmatpush.bf16.msra.mxu0 %v539
  %746 = vmatpush.bf16.msra.mxu0 %v536
  %747 = vmatpush.bf16.msra.mxu0 %v533
  %748 = vmatpush.bf16.msra.mxu0 %v530
  %749 = vmatpush.bf16.msra.mxu0 %v527
  %750 = vmatmul.bf16.gmra.mxu0 %v38
  %v751 = vpop.f32.mrf.mxu0
  %v752 = vadd.f32 %v181, %v751
  %v753 = vpop.f32.mrf.mxu0
  %754 = vdwg.mxu0
  %755 = vmatpush.bf16.msra.mxu0 %v572
  %756 = vmatpush.bf16.msra.mxu0 %v569
  %757 = vmatpush.bf16.msra.mxu0 %v566
  %758 = vmatpush.bf16.msra.mxu0 %v563
  %759 = vmatpush.bf16.msra.mxu0 %v560
  %760 = vmatpush.bf16.msra.mxu0 %v557
  %761 = vmatpush.bf16.msra.mxu0 %v554
  %762 = vmatpush.bf16.msra.mxu0 %v551
  %763 = vmatmul.bf16.gmra.mxu0 %v39
  %v764 = vpop.f32.mrf.mxu0
  %v765 = vadd.f32 %v752, %v764
  %v766 = vpop.f32.mrf.mxu0
  %767 = vdwg.mxu0
  %768 = vmatpush.bf16.msra.mxu0 %v596
  %769 = vmatpush.bf16.msra.mxu0 %v593
  %770 = vmatpush.bf16.msra.mxu0 %v590
  %771 = vmatpush.bf16.msra.mxu0 %v587
  %772 = vmatpush.bf16.msra.mxu0 %v584
  %773 = vmatpush.bf16.msra.mxu0 %v581
  %774 = vmatpush.bf16.msra.mxu0 %v578
  %775 = vmatpush.bf16.msra.mxu0 %v575
  %776 = vmatmul.bf16.gmra.mxu0 %v40
  %v777 = vpop.f32.mrf.mxu0
  %v778 = vadd.f32 %v765, %v777
  %v779 = vpop.f32.mrf.mxu0
  %780 = vdwg.mxu0
  %781 = vmatpush.bf16.msra.mxu0 %v620
  %782 = vmatpush.bf16.msra.mxu0 %v617
  %783 = vmatpush.bf16.msra.mxu0 %v614
  %784 = vmatpush.bf16.msra.mxu0 %v611
  %785 = vmatpush.bf16.msra.mxu0 %v608
  %786 = vmatpush.bf16.msra.mxu0 %v605
  %787 = vmatpush.bf16.msra.mxu0 %v602
  %788 = vmatpush.bf16.msra.mxu0 %v599
  %789 = vmatmul.bf16.gmra.mxu0 %v41
  %v790 = vpop.f32.mrf.mxu0
  %v791 = vadd.f32 %v778, %v790
  %v792 = vpop.f32.mrf.mxu0
  %793 = vdwg.mxu0
  %794 = vmatpush.bf16.msra.mxu0 0
  %795 = vmatpush.bf16.msra.mxu0 0
  %796 = vmatpush.bf16.msra.mxu0 0
  %797 = vmatpush.bf16.msra.mxu0 0
  %798 = vmatpush.bf16.msra.mxu0 0
  %799 = vmatpush.bf16.msra.mxu0 0
  %800 = vmatpush.bf16.msra.mxu0 %v734
  %801 = vmatpush.bf16.msra.mxu0 %v623
  %802 = vmatmul.bf16.gmra.mxu0 %v730
  %v803 = vpop.f32.mrf.mxu0
  %v804 = vadd.f32 %v791, %v803
  %v805 = vpop.f32.mrf.mxu0
  %806 = vdwg.mxu0
  %807 = vmatpush.bf16.msra.mxu0 %v549
  %808 = vmatpush.bf16.msra.mxu0 %v546
  %809 = vmatpush.bf16.msra.mxu0 %v543
  %810 = vmatpush.bf16.msra.mxu0 %v540
  %811 = vmatpush.bf16.msra.mxu0 %v537
  %812 = vmatpush.bf16.msra.mxu0 %v534
  %813 = vmatpush.bf16.msra.mxu0 %v531
  %814 = vmatpush.bf16.msra.mxu0 %v528
  %815 = vmatmul.bf16.gmra.mxu0 %v38
  %v816 = vpop.f32.mrf.mxu0
  %v817 = vadd.f32 %v182, %v816
  %v818 = vpop.f32.mrf.mxu0
  %819 = vdwg.mxu0
  %820 = vmatpush.bf16.msra.mxu0 %v573
  %821 = vmatpush.bf16.msra.mxu0 %v570
  %822 = vmatpush.bf16.msra.mxu0 %v567
  %823 = vmatpush.bf16.msra.mxu0 %v564
  %824 = vmatpush.bf16.msra.mxu0 %v561
  %825 = vmatpush.bf16.msra.mxu0 %v558
  %826 = vmatpush.bf16.msra.mxu0 %v555
  %827 = vmatpush.bf16.msra.mxu0 %v552
  %828 = vmatmul.bf16.gmra.mxu0 %v39
  %v829 = vpop.f32.mrf.mxu0
  %v830 = vadd.f32 %v817, %v829
  %v831 = vpop.f32.mrf.mxu0
  %832 = vdwg.mxu0
  %833 = vmatpush.bf16.msra.mxu0 %v597
  %834 = vmatpush.bf16.msra.mxu0 %v594
  %835 = vmatpush.bf16.msra.mxu0 %v591
  %836 = vmatpush.bf16.msra.mxu0 %v588
  %837 = vmatpush.bf16.msra.mxu0 %v585
  %838 = vmatpush.bf16.msra.mxu0 %v582
  %839 = vmatpush.bf16.msra.mxu0 %v579
  %840 = vmatpush.bf16.msra.mxu0 %v576
  %841 = vmatmul.bf16.gmra.mxu0 %v40
  %v842 = vpop.f32.mrf.mxu0
  %v843 = vadd.f32 %v830, %v842
  %v844 = vpop.f32.mrf.mxu0
  %845 = vdwg.mxu0
  %846 = vmatpush.bf16.msra.mxu0 %v621
  %847 = vmatpush.bf16.msra.mxu0 %v618
  %848 = vmatpush.bf16.msra.mxu0 %v615
  %849 = vmatpush.bf16.msra.mxu0 %v612
  %850 = vmatpush.bf16.msra.mxu0 %v609
  %851 = vmatpush.bf16.msra.mxu0 %v606
  %852 = vmatpush.bf16.msra.mxu0 %v603
  %853 = vmatpush.bf16.msra.mxu0 %v600
  %854 = vmatmul.bf16.gmra.mxu0 %v41
  %v855 = vpop.f32.mrf.mxu0
  %v856 = vadd.f32 %v843, %v855
  %v857 = vpop.f32.mrf.mxu0
  %858 = vdwg.mxu0
  %859 = vmatpush.bf16.msra.mxu0 0
  %860 = vmatpush.bf16.msra.mxu0 0
  %861 = vmatpush.bf16.msra.mxu0 0
  %862 = vmatpush.bf16.msra.mxu0 0
  %863 = vmatpush.bf16.msra.mxu0 0
  %864 = vmatpush.bf16.msra.mxu0 0
  %865 = vmatpush.bf16.msra.mxu0 %v737
  %866 = vmatpush.bf16.msra.mxu0 %v624
  %867 = vmatmul.bf16.gmra.mxu0 %v730
  %v868 = vpop.f32.mrf.mxu0
  %v869 = vadd.f32 %v856, %v868
  %v870 = vpop.f32.mrf.mxu0
  %871 = vdwg.mxu0
  %872 = vmatpush.bf16.msra.mxu0 %v550
  %873 = vmatpush.bf16.msra.mxu0 %v547
  %874 = vmatpush.bf16.msra.mxu0 %v544
  %875 = vmatpush.bf16.msra.mxu0 %v541
  %876 = vmatpush.bf16.msra.mxu0 %v538
  %877 = vmatpush.bf16.msra.mxu0 %v535
  %878 = vmatpush.bf16.msra.mxu0 %v532
  %879 = vmatpush.bf16.msra.mxu0 %v529
  %880 = vmatmul.bf16.gmra.mxu0 %v38
  %v881 = vpop.f32.mrf.mxu0
  %v882 = vadd.f32 %v183, %v881
  %v883 = vpop.f32.mrf.mxu0
  %884 = vdwg.mxu0
  %885 = vmatpush.bf16.msra.mxu0 %v574
  %886 = vmatpush.bf16.msra.mxu0 %v571
  %887 = vmatpush.bf16.msra.mxu0 %v568
  %888 = vmatpush.bf16.msra.mxu0 %v565
  %889 = vmatpush.bf16.msra.mxu0 %v562
  %890 = vmatpush.bf16.msra.mxu0 %v559
  %891 = vmatpush.bf16.msra.mxu0 %v556
  %892 = vmatpush.bf16.msra.mxu0 %v553
  %893 = vmatmul.bf16.gmra.mxu0 %v39
  %v894 = vpop.f32.mrf.mxu0
  %v895 = vadd.f32 %v882, %v894
  %v896 = vpop.f32.mrf.mxu0
  %897 = vdwg.mxu0
  %898 = vmatpush.bf16.msra.mxu0 %v598
  %899 = vmatpush.bf16.msra.mxu0 %v595
  %900 = vmatpush.bf16.msra.mxu0 %v592
  %901 = vmatpush.bf16.msra.mxu0 %v589
  %902 = vmatpush.bf16.msra.mxu0 %v586
  %903 = vmatpush.bf16.msra.mxu0 %v583
  %904 = vmatpush.bf16.msra.mxu0 %v580
  %905 = vmatpush.bf16.msra.mxu0 %v577
  %906 = vmatmul.bf16.gmra.mxu0 %v40
  %v907 = vpop.f32.mrf.mxu0
  %v908 = vadd.f32 %v895, %v907
  %v909 = vpop.f32.mrf.mxu0
  %910 = vdwg.mxu0
  %911 = vmatpush.bf16.msra.mxu0 %v622
  %912 = vmatpush.bf16.msra.mxu0 %v619
  %913 = vmatpush.bf16.msra.mxu0 %v616
  %914 = vmatpush.bf16.msra.mxu0 %v613
  %915 = vmatpush.bf16.msra.mxu0 %v610
  %916 = vmatpush.bf16.msra.mxu0 %v607
  %917 = vmatpush.bf16.msra.mxu0 %v604
  %918 = vmatpush.bf16.msra.mxu0 %v601
  %919 = vmatmul.bf16.gmra.mxu0 %v41
  %v920 = vpop.f32.mrf.mxu0
  %v921 = vadd.f32 %v908, %v920
  %v922 = vpop.f32.mrf.mxu0
  %923 = vdwg.mxu0
  %924 = vmatpush.bf16.msra.mxu0 0
  %925 = vmatpush.bf16.msra.mxu0 0
  %926 = vmatpush.bf16.msra.mxu0 0
  %927 = vmatpush.bf16.msra.mxu0 0
  %928 = vmatpush.bf16.msra.mxu0 0
  %929 = vmatpush.bf16.msra.mxu0 0
  %930 = vmatpush.bf16.msra.mxu0 %v740
  %931 = vmatpush.bf16.msra.mxu0 %v625
  %932 = vmatmul.bf16.gmra.mxu0 %v730
  %v933 = vpop.f32.mrf.mxu0
  %v934 = vadd.f32 %v921, %v933
  %v935 = vpop.f32.mrf.mxu0
  %936 = vdwg.mxu0
  %v937 = vmax.f32 %v804, 0.0
  %v938 = vmax.f32 %v869, 0.0
  %v939 = vmax.f32 %v934, 0.0
  %v940 = vpack.c.bf16 %v937, %v937
  %v941 = vpack.c.bf16 %v938, %v938
  %v942 = vpack.c.bf16 %v939, %v939
  %v943 = vld [vmem:[%s3] sm:$0xff]
  %v944 = vld [vmem:[%s3 + $0x8] sm:$0xff]
  %v945 = vld [vmem:[%s3 + $0x10] sm:$0xff]
  %v946 = vld [vmem:[%s3 + $0x18] sm:$0xff]
  %v947 = vld [vmem:[%s3 + $0x20] sm:$0xff]
  %v948 = vld [vmem:[%s3 + $0x28] sm:$0xff]
  %v949 = vld [vmem:[%s3 + $0x30] sm:$0xff]
  %v950 = vld [vmem:[%s3 + $0x38] sm:$0xff]
  %v951 = vld [vmem:[%s3 + $0x40] sm:$0xff]
  %v952 = vld [vmem:[%s3 + $0x48] sm:$0xff]
  %v953 = vld [vmem:[%s3 + $0x50] sm:$0xff]
  %v954 = vld [vmem:[%s3 + $0x58] sm:$0xff]
  %v955 = vld [vmem:[%s3 + $0x60] sm:$0xff]
  %v956 = vld [vmem:[%s3 + $0x68] sm:$0xff]
  %v957 = vld [vmem:[%s3 + $0x70] sm:$0xff]
  %v958 = vld [vmem:[%s3 + $0x78] sm:$0xff]
  %v959 = vld [vmem:[%s3 + $0x80] sm:$0xff]
  %v960 = vld [vmem:[%s3 + $0x88] sm:$0xff]
  %v961 = vld [vmem:[%s3 + $0x90] sm:$0xff]
  %v962 = vld [vmem:[%s3 + $0x98] sm:$0xff]
  %v963 = vld [vmem:[%s3 + $0xa0] sm:$0xff]
  %v964 = vld [vmem:[%s3 + $0xa8] sm:$0xff]
  %v965 = vld [vmem:[%s3 + $0xb0] sm:$0xff]
  %v966 = vld [vmem:[%s3 + $0xb8] sm:$0xff]
  %v967 = vld [vmem:[%s3 + $0xc0] sm:$0xff]
  %v968 = vld [vmem:[%s3 + $0xc8] sm:$0xff]
  %v969 = vld [vmem:[%s3 + $0xd0] sm:$0xff]
  %v970 = vld [vmem:[%s3 + $0xd8] sm:$0xff]
  %v971 = vld [vmem:[%s3 + $0xe0] sm:$0xff]
  %v972 = vld [vmem:[%s3 + $0xe8] sm:$0xff]
  %v973 = vld [vmem:[%s3 + $0xf0] sm:$0xff]
  %v974 = vld [vmem:[%s3 + $0xf8] sm:$0xff]
  %v975 = vld [vmem:[%s3 + $0x100] sm:$0xff]
  %v976 = vld [vmem:[%s3 + $0x108] sm:$0xff]
  %v977 = vld [vmem:[%s3 + $0x110] sm:$0xff]
  %v978 = vld [vmem:[%s3 + $0x118] sm:$0xff]
  %v979 = vld [vmem:[%s3 + $0x120] sm:$0xff]
  %v980 = vld [vmem:[%s3 + $0x128] sm:$0x33]
  %v981 = vld [vmem:[%s4] sm:$0x3]
  %v983 = vperm.slane %v981, 0
  %v984 = vperm.slane %v981, 1
  %v1025 = vunpack.c.l.b16 %v943
  %v1026 = vunpack.c.h.b16 %v943
  %v1027 = vunpack.c.l.b16 %v944
  %v1028 = vunpack.c.h.b16 %v944
  %v1029 = vunpack.c.l.b16 %v945
  %v1030 = vunpack.c.h.b16 %v945
  %v1031 = vunpack.c.l.b16 %v946
  %v1032 = vunpack.c.h.b16 %v946
  %v1033 = vunpack.c.l.b16 %v947
  %v1034 = vunpack.c.h.b16 %v947
  %v1035 = vunpack.c.l.b16 %v948
  %v1036 = vunpack.c.h.b16 %v948
  %v1037 = vunpack.c.l.b16 %v949
  %v1038 = vunpack.c.h.b16 %v949
  %v1039 = vunpack.c.l.b16 %v950
  %v1040 = vunpack.c.h.b16 %v950
  %v1041 = vunpack.c.l.b16 %v951
  %v1042 = vunpack.c.h.b16 %v951
  %v1043 = vunpack.c.l.b16 %v952
  %v1044 = vunpack.c.h.b16 %v952
  %v1045 = vunpack.c.l.b16 %v953
  %v1046 = vunpack.c.h.b16 %v953
  %v1047 = vunpack.c.l.b16 %v954
  %v1048 = vunpack.c.h.b16 %v954
  %v1049 = vunpack.c.l.b16 %v955
  %v1050 = vunpack.c.h.b16 %v955
  %v1051 = vunpack.c.l.b16 %v956
  %v1052 = vunpack.c.h.b16 %v956
  %v1053 = vunpack.c.l.b16 %v957
  %v1054 = vunpack.c.h.b16 %v957
  %v1055 = vunpack.c.l.b16 %v958
  %v1056 = vunpack.c.h.b16 %v958
  %v1057 = vunpack.c.l.b16 %v959
  %v1058 = vunpack.c.h.b16 %v959
  %v1059 = vunpack.c.l.b16 %v960
  %v1060 = vunpack.c.h.b16 %v960
  %v1061 = vunpack.c.l.b16 %v961
  %v1062 = vunpack.c.h.b16 %v961
  %v1063 = vunpack.c.l.b16 %v962
  %v1064 = vunpack.c.h.b16 %v962
  %v1065 = vunpack.c.l.b16 %v963
  %v1066 = vunpack.c.h.b16 %v963
  %v1067 = vunpack.c.l.b16 %v964
  %v1068 = vunpack.c.h.b16 %v964
  %v1069 = vunpack.c.l.b16 %v965
  %v1070 = vunpack.c.h.b16 %v965
  %v1071 = vunpack.c.l.b16 %v966
  %v1072 = vunpack.c.h.b16 %v966
  %v1073 = vunpack.c.l.b16 %v967
  %v1074 = vunpack.c.h.b16 %v967
  %v1075 = vunpack.c.l.b16 %v968
  %v1076 = vunpack.c.h.b16 %v968
  %v1077 = vunpack.c.l.b16 %v969
  %v1078 = vunpack.c.h.b16 %v969
  %v1079 = vunpack.c.l.b16 %v970
  %v1080 = vunpack.c.h.b16 %v970
  %v1081 = vunpack.c.l.b16 %v971
  %v1082 = vunpack.c.h.b16 %v971
  %v1083 = vunpack.c.l.b16 %v972
  %v1084 = vunpack.c.h.b16 %v972
  %v1085 = vunpack.c.l.b16 %v973
  %v1086 = vunpack.c.h.b16 %v973
  %v1087 = vunpack.c.l.b16 %v974
  %v1088 = vunpack.c.h.b16 %v974
  %v1089 = vunpack.c.l.b16 %v975
  %v1090 = vunpack.c.h.b16 %v975
  %v1091 = vunpack.c.l.b16 %v976
  %v1092 = vunpack.c.h.b16 %v976
  %v1093 = vunpack.c.l.b16 %v977
  %v1094 = vunpack.c.h.b16 %v977
  %v1095 = vunpack.c.l.b16 %v978
  %v1096 = vunpack.c.h.b16 %v978
  %v1097 = vunpack.c.l.b16 %v979
  %v1098 = vunpack.c.h.b16 %v979
  %v1099 = vunpack.c.l.b16 %v980
  %v1100 = vunpack.c.h.b16 %v980
  %v1101 = vpack.c.b16 %v1027, %v1025
  %v1102 = vpack.c.b16 %v1028, %v1026
  %v1103 = vpack.c.b16 %v1031, %v1029
  %v1104 = vpack.c.b16 %v1032, %v1030
  %v1105 = vpack.c.b16 %v1035, %v1033
  %v1106 = vpack.c.b16 %v1036, %v1034
  %v1107 = vpack.c.b16 %v1039, %v1037
  %v1108 = vpack.c.b16 %v1040, %v1038
  %v1109 = vpack.c.b16 %v1043, %v1041
  %v1110 = vpack.c.b16 %v1044, %v1042
  %v1111 = vpack.c.b16 %v1047, %v1045
  %v1112 = vpack.c.b16 %v1048, %v1046
  %v1113 = vpack.c.b16 %v1051, %v1049
  %v1114 = vpack.c.b16 %v1052, %v1050
  %v1115 = vpack.c.b16 %v1055, %v1053
  %v1116 = vpack.c.b16 %v1056, %v1054
  %v1117 = vpack.c.b16 %v1059, %v1057
  %v1118 = vpack.c.b16 %v1060, %v1058
  %v1119 = vpack.c.b16 %v1063, %v1061
  %v1120 = vpack.c.b16 %v1064, %v1062
  %v1121 = vpack.c.b16 %v1067, %v1065
  %v1122 = vpack.c.b16 %v1068, %v1066
  %v1123 = vpack.c.b16 %v1071, %v1069
  %v1124 = vpack.c.b16 %v1072, %v1070
  %v1125 = vpack.c.b16 %v1075, %v1073
  %v1126 = vpack.c.b16 %v1076, %v1074
  %v1127 = vpack.c.b16 %v1079, %v1077
  %v1128 = vpack.c.b16 %v1080, %v1078
  %v1129 = vpack.c.b16 %v1083, %v1081
  %v1130 = vpack.c.b16 %v1084, %v1082
  %v1131 = vpack.c.b16 %v1087, %v1085
  %v1132 = vpack.c.b16 %v1088, %v1086
  %v1133 = vpack.c.b16 %v1091, %v1089
  %v1134 = vpack.c.b16 %v1092, %v1090
  %v1135 = vpack.c.b16 %v1095, %v1093
  %v1136 = vpack.c.b16 %v1096, %v1094
  %v1137 = vpack.c.b16 %v1099, %v1097
  %v1138 = vpack.c.b16 %v1100, %v1098
  %vm1175 = vcmask 359424
  %v1177 = vsel %vm1175, %v942, 0
  %v1180 = vsel %vm732, %v1137, 0
  %v1183 = vsel %vm732, %v1138, 0
  %1185 = vmatpush.bf16.msra.mxu0 %v1115
  %1186 = vmatpush.bf16.msra.mxu0 %v1113
  %1187 = vmatpush.bf16.msra.mxu0 %v1111
  %1188 = vmatpush.bf16.msra.mxu0 %v1109
  %1189 = vmatpush.bf16.msra.mxu0 %v1107
  %1190 = vmatpush.bf16.msra.mxu0 %v1105
  %1191 = vmatpush.bf16.msra.mxu0 %v1103
  %1192 = vmatpush.bf16.msra.mxu0 %v1101
  %1193 = vmatmul.bf16.gmra.mxu0 %v940
  %v1194 = vpop.f32.mrf.mxu0
  %v1195 = vadd.f32 %v983, %v1194
  %v1196 = vpop.f32.mrf.mxu0
  %1197 = vdwg.mxu0
  %1198 = vmatpush.bf16.msra.mxu0 %v1131
  %1199 = vmatpush.bf16.msra.mxu0 %v1129
  %1200 = vmatpush.bf16.msra.mxu0 %v1127
  %1201 = vmatpush.bf16.msra.mxu0 %v1125
  %1202 = vmatpush.bf16.msra.mxu0 %v1123
  %1203 = vmatpush.bf16.msra.mxu0 %v1121
  %1204 = vmatpush.bf16.msra.mxu0 %v1119
  %1205 = vmatpush.bf16.msra.mxu0 %v1117
  %1206 = vmatmul.bf16.gmra.mxu0 %v941
  %v1207 = vpop.f32.mrf.mxu0
  %v1208 = vadd.f32 %v1195, %v1207
  %v1209 = vpop.f32.mrf.mxu0
  %1210 = vdwg.mxu0
  %1211 = vmatpush.bf16.msra.mxu0 0
  %1212 = vmatpush.bf16.msra.mxu0 0
  %1213 = vmatpush.bf16.msra.mxu0 0
  %1214 = vmatpush.bf16.msra.mxu0 0
  %1215 = vmatpush.bf16.msra.mxu0 0
  %1216 = vmatpush.bf16.msra.mxu0 %v1180
  %1217 = vmatpush.bf16.msra.mxu0 %v1135
  %1218 = vmatpush.bf16.msra.mxu0 %v1133
  %1219 = vmatmul.bf16.gmra.mxu0 %v1177
  %v1220 = vpop.f32.mrf.mxu0
  %v1221 = vadd.f32 %v1208, %v1220
  %v1222 = vpop.f32.mrf.mxu0
  %1223 = vdwg.mxu0
  %1224 = vmatpush.bf16.msra.mxu0 %v1116
  %1225 = vmatpush.bf16.msra.mxu0 %v1114
  %1226 = vmatpush.bf16.msra.mxu0 %v1112
  %1227 = vmatpush.bf16.msra.mxu0 %v1110
  %1228 = vmatpush.bf16.msra.mxu0 %v1108
  %1229 = vmatpush.bf16.msra.mxu0 %v1106
  %1230 = vmatpush.bf16.msra.mxu0 %v1104
  %1231 = vmatpush.bf16.msra.mxu0 %v1102
  %1232 = vmatmul.bf16.gmra.mxu0 %v940
  %v1233 = vpop.f32.mrf.mxu0
  %v1234 = vadd.f32 %v984, %v1233
  %v1235 = vpop.f32.mrf.mxu0
  %1236 = vdwg.mxu0
  %1237 = vmatpush.bf16.msra.mxu0 %v1132
  %1238 = vmatpush.bf16.msra.mxu0 %v1130
  %1239 = vmatpush.bf16.msra.mxu0 %v1128
  %1240 = vmatpush.bf16.msra.mxu0 %v1126
  %1241 = vmatpush.bf16.msra.mxu0 %v1124
  %1242 = vmatpush.bf16.msra.mxu0 %v1122
  %1243 = vmatpush.bf16.msra.mxu0 %v1120
  %1244 = vmatpush.bf16.msra.mxu0 %v1118
  %1245 = vmatmul.bf16.gmra.mxu0 %v941
  %v1246 = vpop.f32.mrf.mxu0
  %v1247 = vadd.f32 %v1234, %v1246
  %v1248 = vpop.f32.mrf.mxu0
  %1249 = vdwg.mxu0
  %1250 = vmatpush.bf16.msra.mxu0 0
  %1251 = vmatpush.bf16.msra.mxu0 0
  %1252 = vmatpush.bf16.msra.mxu0 0
  %1253 = vmatpush.bf16.msra.mxu0 0
  %1254 = vmatpush.bf16.msra.mxu0 0
  %1255 = vmatpush.bf16.msra.mxu0 %v1183
  %1256 = vmatpush.bf16.msra.mxu0 %v1136
  %1257 = vmatpush.bf16.msra.mxu0 %v1134
  %1258 = vmatmul.bf16.gmra.mxu0 %v1177
  %v1259 = vpop.f32.mrf.mxu0
  %v1260 = vadd.f32 %v1247, %v1259
  %v1261 = vpop.f32.mrf.mxu0
  %1262 = vdwg.mxu0
  %v1263 = vmax.f32 %v1221, 0.0
  %v1264 = vmax.f32 %v1260, 0.0
  %v1265 = vpack.c.bf16 %v1263, %v1263
  %v1266 = vpack.c.bf16 %v1264, %v1264
  %v1267 = vld [vmem:[%s5] sm:$0xf]
  %v1268 = vld [vmem:[%s5 + $0x4] sm:$0xf]
  %v1269 = vld [vmem:[%s5 + $0x8] sm:$0xf]
  %v1270 = vld [vmem:[%s5 + $0xc] sm:$0xf]
  %v1271 = vld [vmem:[%s5 + $0x10] sm:$0xf]
  %v1272 = vld [vmem:[%s5 + $0x14] sm:$0xf]
  %v1273 = vld [vmem:[%s5 + $0x18] sm:$0xf]
  %v1274 = vld [vmem:[%s5 + $0x1c] sm:$0xf]
  %v1275 = vld [vmem:[%s5 + $0x20] sm:$0xf]
  %v1276 = vld [vmem:[%s5 + $0x24] sm:$0xf]
  %v1277 = vld [vmem:[%s5 + $0x28] sm:$0xf]
  %v1278 = vld [vmem:[%s5 + $0x2c] sm:$0xf]
  %v1279 = vld [vmem:[%s5 + $0x30] sm:$0xf]
  %v1280 = vld [vmem:[%s5 + $0x34] sm:$0xf]
  %v1281 = vld [vmem:[%s5 + $0x38] sm:$0xf]
  %v1282 = vld [vmem:[%s5 + $0x3c] sm:$0xf]
  %v1283 = vld [vmem:[%s5 + $0x40] sm:$0xf]
  %v1284 = vld [vmem:[%s5 + $0x44] sm:$0x3]
  %v1285 = vld [vmem:[%s6] sm:$0x1]
  %v1287 = vperm.slane %v1285, 0
  %v1307 = vunpack.c.l.b16 %v1267
  %v1308 = vunpack.c.l.b16 %v1268
  %v1309 = vunpack.c.l.b16 %v1269
  %v1310 = vunpack.c.l.b16 %v1270
  %v1311 = vunpack.c.l.b16 %v1271
  %v1312 = vunpack.c.l.b16 %v1272
  %v1313 = vunpack.c.l.b16 %v1273
  %v1314 = vunpack.c.l.b16 %v1274
  %v1315 = vunpack.c.l.b16 %v1275
  %v1316 = vunpack.c.l.b16 %v1276
  %v1317 = vunpack.c.l.b16 %v1277
  %v1318 = vunpack.c.l.b16 %v1278
  %v1319 = vunpack.c.l.b16 %v1279
  %v1320 = vunpack.c.l.b16 %v1280
  %v1321 = vunpack.c.l.b16 %v1281
  %v1322 = vunpack.c.l.b16 %v1282
  %v1323 = vunpack.c.l.b16 %v1283
  %v1324 = vunpack.c.l.b16 %v1284
  %v1325 = vpack.c.b16 %v1308, %v1307
  %v1326 = vpack.c.b16 %v1310, %v1309
  %v1327 = vpack.c.b16 %v1312, %v1311
  %v1328 = vpack.c.b16 %v1314, %v1313
  %v1329 = vpack.c.b16 %v1316, %v1315
  %v1330 = vpack.c.b16 %v1318, %v1317
  %v1331 = vpack.c.b16 %v1320, %v1319
  %v1332 = vpack.c.b16 %v1322, %v1321
  %v1333 = vpack.c.b16 %v1324, %v1323
  %vm1342 = vcmask 97280
  %v1344 = vsel %vm1342, %v1266, 0
  %v1347 = vsel %vm732, %v1333, 0
  %1349 = vmatpush.bf16.msra.mxu0 %v1332
  %1350 = vmatpush.bf16.msra.mxu0 %v1331
  %1351 = vmatpush.bf16.msra.mxu0 %v1330
  %1352 = vmatpush.bf16.msra.mxu0 %v1329
  %1353 = vmatpush.bf16.msra.mxu0 %v1328
  %1354 = vmatpush.bf16.msra.mxu0 %v1327
  %1355 = vmatpush.bf16.msra.mxu0 %v1326
  %1356 = vmatpush.bf16.msra.mxu0 %v1325
  %1357 = vmatmul.bf16.gmra.mxu0 %v1265
  %v1358 = vpop.f32.mrf.mxu0
  %v1359 = vadd.f32 %v1287, %v1358
  %v1360 = vpop.f32.mrf.mxu0
  %1361 = vdwg.mxu0
  %1362 = vmatpush.bf16.msra.mxu0 0
  %1363 = vmatpush.bf16.msra.mxu0 0
  %1364 = vmatpush.bf16.msra.mxu0 0
  %1365 = vmatpush.bf16.msra.mxu0 0
  %1366 = vmatpush.bf16.msra.mxu0 0
  %1367 = vmatpush.bf16.msra.mxu0 0
  %1368 = vmatpush.bf16.msra.mxu0 0
  %1369 = vmatpush.bf16.msra.mxu0 %v1347
  %1370 = vmatmul.bf16.gmra.mxu0 %v1344
  %v1371 = vpop.f32.mrf.mxu0
  %v1372 = vadd.f32 %v1359, %v1371
  %v1373 = vpop.f32.mrf.mxu0
  %1374 = vdwg.mxu0
  %v1375 = vmax.f32 %v1372, 0.0
  %v1376 = vpack.c.bf16 %v1375, %v1375
  %v1377 = vld [vmem:[%s7] sm:$0xf]
  %v1378 = vld [vmem:[%s7 + $0x4] sm:$0xf]
  %v1379 = vld [vmem:[%s7 + $0x8] sm:$0xf]
  %v1380 = vld [vmem:[%s7 + $0xc] sm:$0xf]
  %v1381 = vld [vmem:[%s7 + $0x10] sm:$0xf]
  %v1382 = vld [vmem:[%s7 + $0x14] sm:$0xf]
  %v1383 = vld [vmem:[%s7 + $0x18] sm:$0xf]
  %v1384 = vld [vmem:[%s7 + $0x1c] sm:$0x3]
  %v1385 = vld [vmem:[%s8] sm:$0x1]
  %v1387 = vperm.slane %v1385, 0
  %v1397 = vunpack.c.l.b16 %v1377
  %v1398 = vunpack.c.l.b16 %v1378
  %v1399 = vunpack.c.l.b16 %v1379
  %v1400 = vunpack.c.l.b16 %v1380
  %v1401 = vunpack.c.l.b16 %v1381
  %v1402 = vunpack.c.l.b16 %v1382
  %v1403 = vunpack.c.l.b16 %v1383
  %v1404 = vunpack.c.l.b16 %v1384
  %v1405 = vpack.c.b16 %v1398, %v1397
  %v1406 = vpack.c.b16 %v1400, %v1399
  %v1407 = vpack.c.b16 %v1402, %v1401
  %v1408 = vpack.c.b16 %v1404, %v1403
  %vm1412 = vcmask 490496
  %v1414 = vsel %vm1412, %v1376, 0
  %v1417 = vsel %vm732, %v1408, 0
  %1419 = vmatpush.bf16.msra.mxu0 0
  %1420 = vmatpush.bf16.msra.mxu0 0
  %1421 = vmatpush.bf16.msra.mxu0 0
  %1422 = vmatpush.bf16.msra.mxu0 0
  %1423 = vmatpush.bf16.msra.mxu0 %v1417
  %1424 = vmatpush.bf16.msra.mxu0 %v1407
  %1425 = vmatpush.bf16.msra.mxu0 %v1406
  %1426 = vmatpush.bf16.msra.mxu0 %v1405
  %1427 = vmatmul.bf16.gmra.mxu0 %v1414
  %v1428 = vpop.f32.mrf.mxu0
  %v1429 = vadd.f32 %v1387, %v1428
  %v1430 = vpop.f32.mrf.mxu0
  %1431 = vdwg.mxu0
  %vm1432 = vcmask 48128
  %1433 = vst.msk [vmem:[%s9] sm:$0xff] %vm1432, %v1429
  // Predicated region
  $region38: #{activity_cnn_forward.1} parent=0 // pred_check
    _
  $region39: #{activity_cnn_forward.1} parent=0 // pred_check_branch
    %1435 = sbr.rel (0) target = $region41
  $region40: #{activity_cnn_forward.1} parent=0 // pred_region
    _
  $region41: #{activity_cnn_forward.1} parent=0 // pred_fallthru
    _
  // Predicated region
  $region42: #{activity_cnn_forward.1} parent=0 // pred_check
    _
  $region43: #{activity_cnn_forward.1} parent=0 // pred_check_branch
    %1437 = sbr.rel (0) target = $region45
  $region44: #{activity_cnn_forward.1} parent=0 // pred_region
    _
  $region45: #{activity_cnn_forward.1} parent=0 // pred_fallthru
    _

</llo_original>
